<compile_context>
chip_gen: v5e
topology: v5e:2x2
jax: 0.10.0
libtpu: 0.0.40
codegen_flags: <defaults>
</compile_context>

<pallas_src>
import jax
import jax.numpy as jnp
from jax.experimental import pallas as pl
from jax.experimental.pallas import tpu as pltpu

D_IN = 784
D_IN_PAD = 896      # 7 * 128 -> lane-dense K for layer 1 and N for layer 4
H1 = 128
H2 = 64
H2_PAD = 128        # encoder output padded to a full lane group


def _round_up(x, m):
    return (x + m - 1) // m * m


def _ae_kernel(x_ref,
               w1_ref, b1_ref, w2_ref, b2_ref,
               w3_ref, b3_ref, w4_ref, b4_ref,
               enc_ref, dec_ref):
    cdt = x_ref.dtype  # compute dtype (f32 or bf16); accumulation is always f32
    x = x_ref[...]

    # Encoder: Linear(784,128)+ReLU, Linear(128,64)+ReLU   (padded dims)
    h1 = jnp.dot(x, w1_ref[...], preferred_element_type=jnp.float32) + b1_ref[...]
    h1 = jnp.maximum(h1, 0.0).astype(cdt)
    enc = jnp.dot(h1, w2_ref[...], preferred_element_type=jnp.float32) + b2_ref[...]
    enc = jnp.maximum(enc, 0.0)

    # Decoder: Linear(64,128)+ReLU, Linear(128,784)+ReLU   (padded dims)
    enc_c = enc.astype(cdt)
    h3 = jnp.dot(enc_c, w3_ref[...], preferred_element_type=jnp.float32) + b3_ref[...]
    h3 = jnp.maximum(h3, 0.0).astype(cdt)
    dec = jnp.dot(h3, w4_ref[...], preferred_element_type=jnp.float32) + b4_ref[...]
    dec = jnp.maximum(dec, 0.0)

    enc_ref[...] = enc.astype(enc_ref.dtype)
    dec_ref[...] = dec.astype(dec_ref.dtype)


def autoencoder_forward(x, params, *, batch_tile=256, compute_dtype=jnp.float32):
    """Fused autoencoder forward. Returns (encode [B,64], decode [B,784])."""
    B, d_in = x.shape
    assert d_in == D_IN
    w1, b1, w2, b2, w3, b3, w4, b4 = params

    # Tile the batch; cap the tile for tiny batches and zero-pad B up to a
    # multiple of the tile (padded rows are computed then sliced away).
    bt = min(batch_tile, _round_up(B, 8))
    B_pad = _round_up(B, bt)

    x_p = jnp.zeros((B_pad, D_IN_PAD), compute_dtype).at[:B, :D_IN].set(
        x.astype(compute_dtype))

    def pad_w(w, rows, cols):
        return jnp.zeros((rows, cols), compute_dtype).at[
            :w.shape[0], :w.shape[1]].set(w.astype(compute_dtype))

    def pad_b(b, cols):
        return jnp.zeros((1, cols), jnp.float32).at[:, :b.shape[1]].set(
            b.astype(jnp.float32))

    w1_p, b1_p = pad_w(w1, D_IN_PAD, H1), pad_b(b1, H1)
    w2_p, b2_p = pad_w(w2, H1, H2_PAD), pad_b(b2, H2_PAD)
    w3_p, b3_p = pad_w(w3, H2_PAD, H1), pad_b(b3, H1)
    w4_p, b4_p = pad_w(w4, H1, D_IN_PAD), pad_b(b4, D_IN_PAD)

    grid = (B_pad // bt,)

    def x_map(i):
        return (i, 0)

    def rep_map(i):
        return (0, 0)

    in_specs = [
        pl.BlockSpec((bt, D_IN_PAD), x_map),        # x tile (streamed)
        pl.BlockSpec((D_IN_PAD, H1), rep_map),      # w1 (resident)
        pl.BlockSpec((1, H1), rep_map),             # b1
        pl.BlockSpec((H1, H2_PAD), rep_map),        # w2
        pl.BlockSpec((1, H2_PAD), rep_map),         # b2
        pl.BlockSpec((H2_PAD, H1), rep_map),        # w3
        pl.BlockSpec((1, H1), rep_map),             # b3
        pl.BlockSpec((H1, D_IN_PAD), rep_map),      # w4
        pl.BlockSpec((1, D_IN_PAD), rep_map),       # b4
    ]
    out_specs = [
        pl.BlockSpec((bt, H2_PAD), x_map),          # encode tile (lane-dense)
        pl.BlockSpec((bt, D_IN_PAD), x_map),        # decode tile (lane-dense)
    ]

    flops = 2 * B_pad * (D_IN_PAD * H1 + H1 * H2_PAD + H2_PAD * H1 + H1 * D_IN_PAD)
    weights = (x_p, w1_p, b1_p, w2_p, b2_p, w3_p, b3_p, w4_p, b4_p)
    bytes_in = sum(int(a.size) * a.dtype.itemsize for a in weights)
    bytes_out = B_pad * H2_PAD * 4 + B_pad * D_IN_PAD * 4
    cost = pl.CostEstimate(flops=int(flops), transcendentals=0,
                           bytes_accessed=int(bytes_in + bytes_out))

    enc_p, dec_p = pl.pallas_call(
        _ae_kernel,
        out_shape=(jax.ShapeDtypeStruct((B_pad, H2_PAD), jnp.float32),
                   jax.ShapeDtypeStruct((B_pad, D_IN_PAD), jnp.float32)),
        grid_spec=pltpu.PrefetchScalarGridSpec(
            num_scalar_prefetch=0,
            grid=grid,
            in_specs=in_specs,
            out_specs=out_specs,
        ),
        compiler_params=pltpu.CompilerParams(
            dimension_semantics=("parallel",),
            vmem_limit_bytes=32 * 1024 * 1024),
        cost_estimate=cost,
    )(*weights)

    return enc_p[:B, :H2], dec_p[:B, :D_IN]


def init_params(key):
    """Deterministic synthetic parameters. Weights in [in, out] layout."""
    ks = jax.random.split(key, 8)

    def lin(kw, kb, fan_in, fan_out):
        bound = 1.0 / jnp.sqrt(fan_in)
        w = jax.random.uniform(kw, (fan_in, fan_out), jnp.float32, -bound, bound)
        b = jax.random.uniform(kb, (1, fan_out), jnp.float32, -bound, bound)
        return w, b

    w1, b1 = lin(ks[0], ks[1], 784, 128)
    w2, b2 = lin(ks[2], ks[3], 128, 64)
    w3, b3 = lin(ks[4], ks[5], 64, 128)
    w4, b4 = lin(ks[6], ks[7], 128, 784)
    return (w1, b1, w2, b2, w3, b3, w4, b4)


def reference_forward(x, params):
    w1, b1, w2, b2, w3, b3, w4, b4 = params
    h1 = jnp.maximum(x @ w1 + b1, 0.0)
    enc = jnp.maximum(h1 @ w2 + b2, 0.0)
    h3 = jnp.maximum(enc @ w3 + b3, 0.0)
    dec = jnp.maximum(h3 @ w4 + b4, 0.0)
    return enc, dec


if __name__ == "__main__":
    key = jax.random.PRNGKey(0)
    kx, kp = jax.random.split(key)
    params = init_params(kp)

    # Small-shape test (B=8): tile is capped to the batch, grid=(1,).
    x_small = jax.random.normal(kx, (8, D_IN), jnp.float32)
    enc, dec = autoencoder_forward(x_small, params)
    jax.block_until_ready((enc, dec))
    enc_ref, dec_ref = reference_forward(x_small, params)
    assert enc.shape == (8, H2) and dec.shape == (8, D_IN)
    assert jnp.allclose(enc, enc_ref, atol=1e-4, rtol=1e-4)
    assert jnp.allclose(dec, dec_ref, atol=1e-4, rtol=1e-4)

    # Larger batch exercises the tiled grid (2 steps of 256 rows, parallel axis).
    x_big = jax.random.normal(kx, (512, D_IN), jnp.float32)
    enc_b, dec_b = autoencoder_forward(x_big, params, batch_tile=256)
    jax.block_until_ready((enc_b, dec_b))
    enc_br, dec_br = reference_forward(x_big, params)
    assert jnp.allclose(enc_b, enc_br, atol=1e-4, rtol=1e-4)
    assert jnp.allclose(dec_b, dec_br, atol=1e-4, rtol=1e-4)

    # Optional bf16 compute path (f32 accumulation) for v6e/v7x throughput.
    enc_h, dec_h = autoencoder_forward(x_big, params, batch_tile=256,
                                       compute_dtype=jnp.bfloat16)
    jax.block_until_ready((enc_h, dec_h))
    assert jnp.allclose(enc_h, enc_br, atol=5e-2, rtol=5e-2)
    assert jnp.allclose(dec_h, dec_br, atol=5e-2, rtol=5e-2)

    print("KERNEL_OK")
</pallas_src>

<mosaic_0001>
module attributes {stable_mosaic.version = 11 : i64} {
  func.func @_ae_kernel(%arg0: i32, %arg1: memref<8x896xf32, #tpu.memory_space<vmem>>, %arg2: memref<896x128xf32, #tpu.memory_space<vmem>>, %arg3: memref<1x128xf32, #tpu.memory_space<vmem>>, %arg4: memref<128x128xf32, #tpu.memory_space<vmem>>, %arg5: memref<1x128xf32, #tpu.memory_space<vmem>>, %arg6: memref<128x128xf32, #tpu.memory_space<vmem>>, %arg7: memref<1x128xf32, #tpu.memory_space<vmem>>, %arg8: memref<128x896xf32, #tpu.memory_space<vmem>>, %arg9: memref<1x896xf32, #tpu.memory_space<vmem>>, %arg10: memref<8x128xf32, #tpu.memory_space<vmem>>, %arg11: memref<8x896xf32, #tpu.memory_space<vmem>>) attributes {dimension_semantics = [#tpu.dimension_semantics<parallel>], iteration_bounds = array<i64: 1>, scalar_prefetch = 0 : i64, scratch_operands = 0 : i64, tpu.core_type = #tpu.core_type<tc>, window_params = [{transform_indices = @transform_0, window_bounds = array<i64: 8, 896>}, {pipeline_mode = #tpu.pipeline_mode<synchronous>, transform_indices = @transform_1, window_bounds = array<i64: 896, 128>}, {pipeline_mode = #tpu.pipeline_mode<synchronous>, transform_indices = @transform_2, window_bounds = array<i64: 1, 128>}, {pipeline_mode = #tpu.pipeline_mode<synchronous>, transform_indices = @transform_3, window_bounds = array<i64: 128, 128>}, {pipeline_mode = #tpu.pipeline_mode<synchronous>, transform_indices = @transform_4, window_bounds = array<i64: 1, 128>}, {pipeline_mode = #tpu.pipeline_mode<synchronous>, transform_indices = @transform_5, window_bounds = array<i64: 128, 128>}, {pipeline_mode = #tpu.pipeline_mode<synchronous>, transform_indices = @transform_6, window_bounds = array<i64: 1, 128>}, {pipeline_mode = #tpu.pipeline_mode<synchronous>, transform_indices = @transform_7, window_bounds = array<i64: 128, 896>}, {pipeline_mode = #tpu.pipeline_mode<synchronous>, transform_indices = @transform_8, window_bounds = array<i64: 1, 896>}, {transform_indices = @transform_9, window_bounds = array<i64: 8, 128>}, {transform_indices = @transform_10, window_bounds = array<i64: 8, 896>}]} {
    %c0 = arith.constant 0 : index
    %c0_0 = arith.constant 0 : index
    %0 = vector.load %arg1[%c0, %c0_0] : memref<8x896xf32, #tpu.memory_space<vmem>>, vector<8x896xf32>
    %c0_1 = arith.constant 0 : index
    %c0_2 = arith.constant 0 : index
    %1 = vector.load %arg2[%c0_1, %c0_2] : memref<896x128xf32, #tpu.memory_space<vmem>>, vector<896x128xf32>
    %cst = arith.constant dense<0.000000e+00> : vector<8x128xf32>
    %2 = tpu.matmul %0, %1, %cst {dimension_numbers = #tpu.dot_dimension_numbers<[1], [0], [0], [1], [0, 0, 1, 1], [], []>} : vector<8x896xf32>, vector<896x128xf32>, vector<8x128xf32> -> vector<8x128xf32>
    %c0_3 = arith.constant 0 : index
    %c0_4 = arith.constant 0 : index
    %3 = vector.load %arg3[%c0_3, %c0_4] : memref<1x128xf32, #tpu.memory_space<vmem>>, vector<1x128xf32>
    %4 = vector.broadcast %3 : vector<1x128xf32> to vector<8x128xf32>
    %5 = arith.addf %2, %4 : vector<8x128xf32>
    %cst_5 = arith.constant 0.000000e+00 : f32
    %6 = vector.broadcast %cst_5 : f32 to vector<8x128xf32>
    %7 = arith.maximumf %5, %6 : vector<8x128xf32>
    %c0_6 = arith.constant 0 : index
    %c0_7 = arith.constant 0 : index
    %8 = vector.load %arg4[%c0_6, %c0_7] : memref<128x128xf32, #tpu.memory_space<vmem>>, vector<128x128xf32>
    %cst_8 = arith.constant dense<0.000000e+00> : vector<8x128xf32>
    %9 = tpu.matmul %7, %8, %cst_8 {dimension_numbers = #tpu.dot_dimension_numbers<[1], [0], [0], [1], [0, 0, 1, 1], [], []>} : vector<8x128xf32>, vector<128x128xf32>, vector<8x128xf32> -> vector<8x128xf32>
    %c0_9 = arith.constant 0 : index
    %c0_10 = arith.constant 0 : index
    %10 = vector.load %arg5[%c0_9, %c0_10] : memref<1x128xf32, #tpu.memory_space<vmem>>, vector<1x128xf32>
    %11 = vector.broadcast %10 : vector<1x128xf32> to vector<8x128xf32>
    %12 = arith.addf %9, %11 : vector<8x128xf32>
    %cst_11 = arith.constant 0.000000e+00 : f32
    %13 = vector.broadcast %cst_11 : f32 to vector<8x128xf32>
    %14 = arith.maximumf %12, %13 : vector<8x128xf32>
    %c0_12 = arith.constant 0 : index
    %c0_13 = arith.constant 0 : index
    %15 = vector.load %arg6[%c0_12, %c0_13] : memref<128x128xf32, #tpu.memory_space<vmem>>, vector<128x128xf32>
    %cst_14 = arith.constant dense<0.000000e+00> : vector<8x128xf32>
    %16 = tpu.matmul %14, %15, %cst_14 {dimension_numbers = #tpu.dot_dimension_numbers<[1], [0], [0], [1], [0, 0, 1, 1], [], []>} : vector<8x128xf32>, vector<128x128xf32>, vector<8x128xf32> -> vector<8x128xf32>
    %c0_15 = arith.constant 0 : index
    %c0_16 = arith.constant 0 : index
    %17 = vector.load %arg7[%c0_15, %c0_16] : memref<1x128xf32, #tpu.memory_space<vmem>>, vector<1x128xf32>
    %18 = vector.broadcast %17 : vector<1x128xf32> to vector<8x128xf32>
    %19 = arith.addf %16, %18 : vector<8x128xf32>
    %cst_17 = arith.constant 0.000000e+00 : f32
    %20 = vector.broadcast %cst_17 : f32 to vector<8x128xf32>
    %21 = arith.maximumf %19, %20 : vector<8x128xf32>
    %c0_18 = arith.constant 0 : index
    %c0_19 = arith.constant 0 : index
    %22 = vector.load %arg8[%c0_18, %c0_19] : memref<128x896xf32, #tpu.memory_space<vmem>>, vector<128x896xf32>
    %cst_20 = arith.constant dense<0.000000e+00> : vector<8x896xf32>
    %23 = tpu.matmul %21, %22, %cst_20 {dimension_numbers = #tpu.dot_dimension_numbers<[1], [0], [0], [1], [0, 0, 1, 1], [], []>} : vector<8x128xf32>, vector<128x896xf32>, vector<8x896xf32> -> vector<8x896xf32>
    %c0_21 = arith.constant 0 : index
    %c0_22 = arith.constant 0 : index
    %24 = vector.load %arg9[%c0_21, %c0_22] : memref<1x896xf32, #tpu.memory_space<vmem>>, vector<1x896xf32>
    %25 = vector.broadcast %24 : vector<1x896xf32> to vector<8x896xf32>
    %26 = arith.addf %23, %25 : vector<8x896xf32>
    %cst_23 = arith.constant 0.000000e+00 : f32
    %27 = vector.broadcast %cst_23 : f32 to vector<8x896xf32>
    %28 = arith.maximumf %26, %27 : vector<8x896xf32>
    %c0_24 = arith.constant 0 : index
    %c0_25 = arith.constant 0 : index
    %29 = vector.load %arg10[%c0_24, %c0_25] : memref<8x128xf32, #tpu.memory_space<vmem>>, vector<8x128xf32>
    tpu.vector_store %arg10[%c0_24, %c0_25], %14 {strides = array<i32>} : memref<8x128xf32, #tpu.memory_space<vmem>>, vector<8x128xf32>,
    %c0_26 = arith.constant 0 : index
    %c0_27 = arith.constant 0 : index
    %30 = vector.load %arg11[%c0_26, %c0_27] : memref<8x896xf32, #tpu.memory_space<vmem>>, vector<8x896xf32>
    tpu.vector_store %arg11[%c0_26, %c0_27], %28 {strides = array<i32>} : memref<8x896xf32, #tpu.memory_space<vmem>>, vector<8x896xf32>,
    return
  }
  func.func @transform_0(%arg0: i32) -> (i32, i32) {
    %c0_i32 = arith.constant 0 : i32
    %c0_i32_0 = arith.constant 0 : i32
    return %arg0, %c0_i32 : i32, i32
  }
  func.func @transform_1(%arg0: i32) -> (i32, i32) {
    %c0_i32 = arith.constant 0 : i32
    %c0_i32_0 = arith.constant 0 : i32
    %c0_i32_1 = arith.constant 0 : i32
    return %c0_i32, %c0_i32_0 : i32, i32
  }
  func.func @transform_2(%arg0: i32) -> (i32, i32) {
    %c0_i32 = arith.constant 0 : i32
    %c0_i32_0 = arith.constant 0 : i32
    %c0_i32_1 = arith.constant 0 : i32
    return %c0_i32, %c0_i32_0 : i32, i32
  }
  func.func @transform_3(%arg0: i32) -> (i32, i32) {
    %c0_i32 = arith.constant 0 : i32
    %c0_i32_0 = arith.constant 0 : i32
    %c0_i32_1 = arith.constant 0 : i32
    return %c0_i32, %c0_i32_0 : i32, i32
  }
  func.func @transform_4(%arg0: i32) -> (i32, i32) {
    %c0_i32 = arith.constant 0 : i32
    %c0_i32_0 = arith.constant 0 : i32
    %c0_i32_1 = arith.constant 0 : i32
    return %c0_i32, %c0_i32_0 : i32, i32
  }
  func.func @transform_5(%arg0: i32) -> (i32, i32) {
    %c0_i32 = arith.constant 0 : i32
    %c0_i32_0 = arith.constant 0 : i32
    %c0_i32_1 = arith.constant 0 : i32
    return %c0_i32, %c0_i32_0 : i32, i32
  }
  func.func @transform_6(%arg0: i32) -> (i32, i32) {
    %c0_i32 = arith.constant 0 : i32
    %c0_i32_0 = arith.constant 0 : i32
    %c0_i32_1 = arith.constant 0 : i32
    return %c0_i32, %c0_i32_0 : i32, i32
  }
  func.func @transform_7(%arg0: i32) -> (i32, i32) {
    %c0_i32 = arith.constant 0 : i32
    %c0_i32_0 = arith.constant 0 : i32
    %c0_i32_1 = arith.constant 0 : i32
    return %c0_i32, %c0_i32_0 : i32, i32
  }
  func.func @transform_8(%arg0: i32) -> (i32, i32) {
    %c0_i32 = arith.constant 0 : i32
    %c0_i32_0 = arith.constant 0 : i32
    %c0_i32_1 = arith.constant 0 : i32
    return %c0_i32, %c0_i32_0 : i32, i32
  }
  func.func @transform_9(%arg0: i32) -> (i32, i32) {
    %c0_i32 = arith.constant 0 : i32
    %c0_i32_0 = arith.constant 0 : i32
    return %arg0, %c0_i32 : i32, i32
  }
  func.func @transform_10(%arg0: i32) -> (i32, i32) {
    %c0_i32 = arith.constant 0 : i32
    %c0_i32_0 = arith.constant 0 : i32
    return %arg0, %c0_i32 : i32, i32
  }
}

</mosaic_0001>

<llo_original>
// kernel: tpu_custom_call.1
$region0: #{tpu_custom_call.1}
  #allocation0 [shape = 'u32[]', space=smem, size = 0x4, offset = 0x4, fixed_abs, tag = 'smem constant byte address 0x4 - core index']
  #allocation1 [shape = 'u32[72,128]{1,0:T(1,128)}', space=vmem, size = 0x9000, scoped, tag = 'internal scratch']
  %s0 = inlined_call_operand.hbm [shape: f32[8,896], index: 0, kind: input, shape index: {}]
  %s1 = inlined_call_operand.hbm [shape: f32[896,128], index: 1, kind: input, shape index: {}]
  %s2 = inlined_call_operand.hbm [shape: f32[1,128], index: 2, kind: input, shape index: {}]
  %s3 = inlined_call_operand.hbm [shape: f32[128,128], index: 3, kind: input, shape index: {}]
  %s4 = inlined_call_operand.hbm [shape: f32[1,128], index: 4, kind: input, shape index: {}]
  %s5 = inlined_call_operand.hbm [shape: f32[128,128], index: 5, kind: input, shape index: {}]
  %s6 = inlined_call_operand.hbm [shape: f32[1,128], index: 6, kind: input, shape index: {}]
  %s7 = inlined_call_operand.hbm [shape: f32[128,896], index: 7, kind: input, shape index: {}]
  %s8 = inlined_call_operand.vmem [shape: f32[1,896], index: 8, kind: input, shape index: {}]
  %s9 = inlined_call_operand.hbm [shape: f32[8,128], index: 9, kind: output, shape index: {0}]
  %s10 = inlined_call_operand.hbm [shape: f32[8,896], index: 10, kind: output, shape index: {1}]
  %11 = xla_tuple %s9, %s10
  %s12 = sld [smem:[#allocation0]]
  $region86: #{tpu_custom_call.1} parent=0
    _
  %s14 = ssub.s32 1, %s12
  %s15 = scalar_select 0, %s14, %s12
  $region1: #{tpu_custom_call.1} parent=0
    #allocation2 [shape = 'u8[28672]{0}', space=vmem, size = 0x7000, scoped, tag = 'input window, operand 0, single buffered']
    #allocation3 [shape = 's32[1]{0}', space=sflag, size = 0x4, scoped, tag = 'scoped memory for tpu_custom_call.1']
    #allocation4 [shape = 's32[1]{0}', space=sflag, size = 0x4, scoped, tag = 'scoped memory for tpu_custom_call.1']
    #allocation5 [shape = 'u8[458752]{0}', space=vmem, size = 0x70000, scoped, tag = 'input window, operand 1, single buffered']
    #allocation6 [shape = 's32[1]{0}', space=sflag, size = 0x4, scoped, tag = 'scoped memory for tpu_custom_call.1']
    #allocation7 [shape = 'u8[512]{0}', space=vmem, size = 0x400, scoped, tag = 'input window, operand 2, single buffered']
    #allocation8 [shape = 'u8[65536]{0}', space=vmem, size = 0x10000, scoped, tag = 'input window, operand 3, single buffered']
    #allocation9 [shape = 's32[1]{0}', space=sflag, size = 0x4, scoped, tag = 'scoped memory for tpu_custom_call.1']
    #allocation10 [shape = 'u8[512]{0}', space=vmem, size = 0x400, scoped, tag = 'input window, operand 4, single buffered']
    #allocation11 [shape = 'u8[65536]{0}', space=vmem, size = 0x10000, scoped, tag = 'input window, operand 5, single buffered']
    #allocation12 [shape = 's32[1]{0}', space=sflag, size = 0x4, scoped, tag = 'scoped memory for tpu_custom_call.1']
    #allocation13 [shape = 'u8[512]{0}', space=vmem, size = 0x400, scoped, tag = 'input window, operand 6, single buffered']
    #allocation14 [shape = 'u8[458752]{0}', space=vmem, size = 0x70000, scoped, tag = 'input window, operand 7, single buffered']
    #allocation15 [shape = 's32[1]{0}', space=sflag, size = 0x4, scoped, tag = 'scoped memory for tpu_custom_call.1']
    #allocation16 [shape = 'u8[4096]{0}', space=vmem, size = 0x1000, scoped, tag = 'output window, operand 0, single buffered']
    #allocation17 [shape = 'u8[28672]{0}', space=vmem, size = 0x7000, scoped, tag = 'output window, operand 1, single buffered']
    #allocation18 [shape = 's32[1]{0}', space=sflag, size = 0x4, scoped, tag = 'scoped memory for tpu_custom_call.1']
    %16 = vsyncpa [#allocation3], 0
    %17 = vsyncpa [#allocation6], 0
    %18 = vsyncpa [#allocation9], 0
    %19 = vsyncpa [#allocation12], 0
    %20 = vsyncpa [#allocation15], 0
    %21 = vsyncpa [#allocation4], 0
    %22 = vsyncpa [#allocation18], 0
    // Predicated region
    $region2: #{tpu_custom_call.1} parent=1 // pred_check
      _
    $region3: #{tpu_custom_call.1} parent=1 // pred_check_branch
      %24 = sbr.rel (0) target = $region5
    $region4: #{tpu_custom_call.1} parent=1 // pred_region
      %26 = vsyncadd [#allocation3], 0
      %s28 = sshll.u32 %s0, 4
      %s29 = int_to_ptr.hbm [resolvable:$true] %s28
      %s30 = sshll.u32 [#allocation2], 4
      %s31 = int_to_ptr.vmem [resolvable:$true] %s30
      %33 = dma.hbm_to_vmem [thread:$0]  %s29, 896, %s31, [#allocation3]
    $region5: #{tpu_custom_call.1} parent=1 // pred_fallthru
      _
    // Predicated region
    $region6: #{tpu_custom_call.1} parent=1 // pred_check
      _
    $region7: #{tpu_custom_call.1} parent=1 // pred_check_branch
      %35 = sbr.rel (0) target = $region9
    $region8: #{tpu_custom_call.1} parent=1 // pred_region
      %37 = vsyncadd [#allocation6], 0
      %s38 = sshll.u32 %s1, 4
      %s39 = int_to_ptr.hbm [resolvable:$true] %s38
      %s40 = sshll.u32 [#allocation5], 4
      %s41 = int_to_ptr.vmem [resolvable:$true] %s40
      %46 = dma.hbm_to_vmem [thread:$0]  %s39, 14336, %s41, [#allocation6], 128, 128, 8
    $region9: #{tpu_custom_call.1} parent=1 // pred_fallthru
      _
    // Predicated region
    $region10: #{tpu_custom_call.1} parent=1 // pred_check
      _
    $region11: #{tpu_custom_call.1} parent=1 // pred_check_branch
      %48 = sbr.rel (0) target = $region13
    $region12: #{tpu_custom_call.1} parent=1 // pred_region
      %50 = vsyncadd [#allocation6], 0
      %s52 = sshll.u32 %s2, 4
      %s53 = int_to_ptr.hbm [resolvable:$true] %s52
      %s54 = sshll.u32 [#allocation7], 4
      %s55 = int_to_ptr.vmem [resolvable:$true] %s54
      %57 = dma.hbm_to_vmem [thread:$0]  %s53, 16, %s55, [#allocation6]
    $region13: #{tpu_custom_call.1} parent=1 // pred_fallthru
      _
    // Predicated region
    $region14: #{tpu_custom_call.1} parent=1 // pred_check
      _
    $region15: #{tpu_custom_call.1} parent=1 // pred_check_branch
      %59 = sbr.rel (0) target = $region17
    $region16: #{tpu_custom_call.1} parent=1 // pred_region
      %61 = vsyncadd [#allocation9], 0
      %s62 = sshll.u32 %s3, 4
      %s63 = int_to_ptr.hbm [resolvable:$true] %s62
      %s64 = sshll.u32 [#allocation8], 4
      %s65 = int_to_ptr.vmem [resolvable:$true] %s64
      %70 = dma.hbm_to_vmem [thread:$0]  %s63, 2048, %s65, [#allocation9], 128, 128, 8
    $region17: #{tpu_custom_call.1} parent=1 // pred_fallthru
      _
    // Predicated region
    $region18: #{tpu_custom_call.1} parent=1 // pred_check
      _
    $region19: #{tpu_custom_call.1} parent=1 // pred_check_branch
      %72 = sbr.rel (0) target = $region21
    $region20: #{tpu_custom_call.1} parent=1 // pred_region
      %74 = vsyncadd [#allocation9], 0
      %s76 = sshll.u32 %s4, 4
      %s77 = int_to_ptr.hbm [resolvable:$true] %s76
      %s78 = sshll.u32 [#allocation10], 4
      %s79 = int_to_ptr.vmem [resolvable:$true] %s78
      %81 = dma.hbm_to_vmem [thread:$0]  %s77, 16, %s79, [#allocation9]
    $region21: #{tpu_custom_call.1} parent=1 // pred_fallthru
      _
    // Predicated region
    $region22: #{tpu_custom_call.1} parent=1 // pred_check
      _
    $region23: #{tpu_custom_call.1} parent=1 // pred_check_branch
      %83 = sbr.rel (0) target = $region25
    $region24: #{tpu_custom_call.1} parent=1 // pred_region
      %85 = vsyncadd [#allocation12], 0
      %s86 = sshll.u32 %s5, 4
      %s87 = int_to_ptr.hbm [resolvable:$true] %s86
      %s88 = sshll.u32 [#allocation11], 4
      %s89 = int_to_ptr.vmem [resolvable:$true] %s88
      %94 = dma.hbm_to_vmem [thread:$0]  %s87, 2048, %s89, [#allocation12], 128, 128, 8
    $region25: #{tpu_custom_call.1} parent=1 // pred_fallthru
      _
    // Predicated region
    $region26: #{tpu_custom_call.1} parent=1 // pred_check
      _
    $region27: #{tpu_custom_call.1} parent=1 // pred_check_branch
      %96 = sbr.rel (0) target = $region29
    $region28: #{tpu_custom_call.1} parent=1 // pred_region
      %98 = vsyncadd [#allocation12], 0
      %s100 = sshll.u32 %s6, 4
      %s101 = int_to_ptr.hbm [resolvable:$true] %s100
      %s102 = sshll.u32 [#allocation13], 4
      %s103 = int_to_ptr.vmem [resolvable:$true] %s102
      %105 = dma.hbm_to_vmem [thread:$0]  %s101, 16, %s103, [#allocation12]
    $region29: #{tpu_custom_call.1} parent=1 // pred_fallthru
      _
    // Predicated region
    $region30: #{tpu_custom_call.1} parent=1 // pred_check
      _
    $region31: #{tpu_custom_call.1} parent=1 // pred_check_branch
      %107 = sbr.rel (0) target = $region33
    $region32: #{tpu_custom_call.1} parent=1 // pred_region
      %109 = vsyncadd [#allocation15], 0
      %s110 = sshll.u32 %s7, 4
      %s111 = int_to_ptr.hbm [resolvable:$true] %s110
      %s112 = sshll.u32 [#allocation14], 4
      %s113 = int_to_ptr.vmem [resolvable:$true] %s112
      %118 = dma.hbm_to_vmem [thread:$0]  %s111, 14336, %s113, [#allocation15], 896, 896, 56
    $region33: #{tpu_custom_call.1} parent=1 // pred_fallthru
      _
    // Predicated region
    $region34: #{tpu_custom_call.1} parent=1 // pred_check
      _
    $region35: #{tpu_custom_call.1} parent=1 // pred_check_branch
      %120 = sbr.rel (0) target = $region37
    $region36: #{tpu_custom_call.1} parent=1 // pred_region
      _
    $region37: #{tpu_custom_call.1} parent=1 // pred_fallthru
      _
    // Predicated region
    $region38: #{tpu_custom_call.1} parent=1 // pred_check
      _
    $region39: #{tpu_custom_call.1} parent=1 // pred_check_branch
      %122 = sbr.rel (0) target = $region41
    $region40: #{tpu_custom_call.1} parent=1 // pred_region
      %124 = dma.done [#allocation3], 896
    $region41: #{tpu_custom_call.1} parent=1 // pred_fallthru
      _
    // Predicated region
    $region42: #{tpu_custom_call.1} parent=1 // pred_check
      _
    $region43: #{tpu_custom_call.1} parent=1 // pred_check_branch
      %126 = sbr.rel (0) target = $region45
    $region44: #{tpu_custom_call.1} parent=1 // pred_region
      %128 = dma.done [#allocation6], 14336
    $region45: #{tpu_custom_call.1} parent=1 // pred_fallthru
      _
    // Predicated region
    $region46: #{tpu_custom_call.1} parent=1 // pred_check
      _
    $region47: #{tpu_custom_call.1} parent=1 // pred_check_branch
      %130 = sbr.rel (0) target = $region49
    $region48: #{tpu_custom_call.1} parent=1 // pred_region
      %132 = dma.done [#allocation6], 16
    $region49: #{tpu_custom_call.1} parent=1 // pred_fallthru
      _
    // Predicated region
    $region50: #{tpu_custom_call.1} parent=1 // pred_check
      _
    $region51: #{tpu_custom_call.1} parent=1 // pred_check_branch
      %134 = sbr.rel (0) target = $region53
    $region52: #{tpu_custom_call.1} parent=1 // pred_region
      %136 = dma.done [#allocation9], 2048
    $region53: #{tpu_custom_call.1} parent=1 // pred_fallthru
      _
    // Predicated region
    $region54: #{tpu_custom_call.1} parent=1 // pred_check
      _
    $region55: #{tpu_custom_call.1} parent=1 // pred_check_branch
      %138 = sbr.rel (0) target = $region57
    $region56: #{tpu_custom_call.1} parent=1 // pred_region
      %140 = dma.done [#allocation9], 16
    $region57: #{tpu_custom_call.1} parent=1 // pred_fallthru
      _
    // Predicated region
    $region58: #{tpu_custom_call.1} parent=1 // pred_check
      _
    $region59: #{tpu_custom_call.1} parent=1 // pred_check_branch
      %142 = sbr.rel (0) target = $region61
    $region60: #{tpu_custom_call.1} parent=1 // pred_region
      %144 = dma.done [#allocation12], 2048
    $region61: #{tpu_custom_call.1} parent=1 // pred_fallthru
      _
    // Predicated region
    $region62: #{tpu_custom_call.1} parent=1 // pred_check
      _
    $region63: #{tpu_custom_call.1} parent=1 // pred_check_branch
      %146 = sbr.rel (0) target = $region65
    $region64: #{tpu_custom_call.1} parent=1 // pred_region
      %148 = dma.done [#allocation12], 16
    $region65: #{tpu_custom_call.1} parent=1 // pred_fallthru
      _
    // Predicated region
    $region66: #{tpu_custom_call.1} parent=1 // pred_check
      _
    $region67: #{tpu_custom_call.1} parent=1 // pred_check_branch
      %150 = sbr.rel (0) target = $region69
    $region68: #{tpu_custom_call.1} parent=1 // pred_region
      %152 = dma.done [#allocation15], 14336
    $region69: #{tpu_custom_call.1} parent=1 // pred_fallthru
      _
    %v153 = vld [vmem:[#allocation2] sm:$0xff]
    %v154 = vld [vmem:[#allocation2 + $0x8] sm:$0xff]
    %v155 = vld [vmem:[#allocation2 + $0x10] sm:$0xff]
    %v156 = vld [vmem:[#allocation2 + $0x18] sm:$0xff]
    %v157 = vld [vmem:[#allocation2 + $0x20] sm:$0xff]
    %v158 = vld [vmem:[#allocation2 + $0x28] sm:$0xff]
    %v159 = vld [vmem:[#allocation2 + $0x30] sm:$0xff]
    %v160 = vld [vmem:[#allocation5] sm:$0xff]
    %v161 = vld [vmem:[#allocation5 + $0x8] sm:$0xff]
    %v162 = vld [vmem:[#allocation5 + $0x10] sm:$0xff]
    %v163 = vld [vmem:[#allocation5 + $0x18] sm:$0xff]
    %v164 = vld [vmem:[#allocation5 + $0x20] sm:$0xff]
    %v165 = vld [vmem:[#allocation5 + $0x28] sm:$0xff]
    %v166 = vld [vmem:[#allocation5 + $0x30] sm:$0xff]
    %v167 = vld [vmem:[#allocation5 + $0x38] sm:$0xff]
    %v168 = vld [vmem:[#allocation5 + $0x40] sm:$0xff]
    %v169 = vld [vmem:[#allocation5 + $0x48] sm:$0xff]
    %v170 = vld [vmem:[#allocation5 + $0x50] sm:$0xff]
    %v171 = vld [vmem:[#allocation5 + $0x58] sm:$0xff]
    %v172 = vld [vmem:[#allocation5 + $0x60] sm:$0xff]
    %v173 = vld [vmem:[#allocation5 + $0x68] sm:$0xff]
    %v174 = vld [vmem:[#allocation5 + $0x70] sm:$0xff]
    %v175 = vld [vmem:[#allocation5 + $0x78] sm:$0xff]
    %v176 = vld [vmem:[#allocation5 + $0x80] sm:$0xff]
    %v177 = vld [vmem:[#allocation5 + $0x88] sm:$0xff]
    %v178 = vld [vmem:[#allocation5 + $0x90] sm:$0xff]
    %v179 = vld [vmem:[#allocation5 + $0x98] sm:$0xff]
    %v180 = vld [vmem:[#allocation5 + $0xa0] sm:$0xff]
    %v181 = vld [vmem:[#allocation5 + $0xa8] sm:$0xff]
    %v182 = vld [vmem:[#allocation5 + $0xb0] sm:$0xff]
    %v183 = vld [vmem:[#allocation5 + $0xb8] sm:$0xff]
    %v184 = vld [vmem:[#allocation5 + $0xc0] sm:$0xff]
    %v185 = vld [vmem:[#allocation5 + $0xc8] sm:$0xff]
    %v186 = vld [vmem:[#allocation5 + $0xd0] sm:$0xff]
    %v187 = vld [vmem:[#allocation5 + $0xd8] sm:$0xff]
    %v188 = vld [vmem:[#allocation5 + $0xe0] sm:$0xff]
    %v189 = vld [vmem:[#allocation5 + $0xe8] sm:$0xff]
    %v190 = vld [vmem:[#allocation5 + $0xf0] sm:$0xff]
    %v191 = vld [vmem:[#allocation5 + $0xf8] sm:$0xff]
    %v192 = vld [vmem:[#allocation5 + $0x100] sm:$0xff]
    %v193 = vld [vmem:[#allocation5 + $0x108] sm:$0xff]
    %v194 = vld [vmem:[#allocation5 + $0x110] sm:$0xff]
    %v195 = vld [vmem:[#allocation5 + $0x118] sm:$0xff]
    %v196 = vld [vmem:[#allocation5 + $0x120] sm:$0xff]
    %v197 = vld [vmem:[#allocation5 + $0x128] sm:$0xff]
    %v198 = vld [vmem:[#allocation5 + $0x130] sm:$0xff]
    %v199 = vld [vmem:[#allocation5 + $0x138] sm:$0xff]
    %v200 = vld [vmem:[#allocation5 + $0x140] sm:$0xff]
    %v201 = vld [vmem:[#allocation5 + $0x148] sm:$0xff]
    %v202 = vld [vmem:[#allocation5 + $0x150] sm:$0xff]
    %v203 = vld [vmem:[#allocation5 + $0x158] sm:$0xff]
    %v204 = vld [vmem:[#allocation5 + $0x160] sm:$0xff]
    %v205 = vld [vmem:[#allocation5 + $0x168] sm:$0xff]
    %v206 = vld [vmem:[#allocation5 + $0x170] sm:$0xff]
    %v207 = vld [vmem:[#allocation5 + $0x178] sm:$0xff]
    %v208 = vld [vmem:[#allocation5 + $0x180] sm:$0xff]
    %v209 = vld [vmem:[#allocation5 + $0x188] sm:$0xff]
    %v210 = vld [vmem:[#allocation5 + $0x190] sm:$0xff]
    %v211 = vld [vmem:[#allocation5 + $0x198] sm:$0xff]
    %v212 = vld [vmem:[#allocation5 + $0x1a0] sm:$0xff]
    %v213 = vld [vmem:[#allocation5 + $0x1a8] sm:$0xff]
    %v214 = vld [vmem:[#allocation5 + $0x1b0] sm:$0xff]
    %v215 = vld [vmem:[#allocation5 + $0x1b8] sm:$0xff]
    %v216 = vld [vmem:[#allocation5 + $0x1c0] sm:$0xff]
    %v217 = vld [vmem:[#allocation5 + $0x1c8] sm:$0xff]
    %v218 = vld [vmem:[#allocation5 + $0x1d0] sm:$0xff]
    %v219 = vld [vmem:[#allocation5 + $0x1d8] sm:$0xff]
    %v220 = vld [vmem:[#allocation5 + $0x1e0] sm:$0xff]
    %v221 = vld [vmem:[#allocation5 + $0x1e8] sm:$0xff]
    %v222 = vld [vmem:[#allocation5 + $0x1f0] sm:$0xff]
    %v223 = vld [vmem:[#allocation5 + $0x1f8] sm:$0xff]
    %v224 = vld [vmem:[#allocation5 + $0x200] sm:$0xff]
    %v225 = vld [vmem:[#allocation5 + $0x208] sm:$0xff]
    %v226 = vld [vmem:[#allocation5 + $0x210] sm:$0xff]
    %v227 = vld [vmem:[#allocation5 + $0x218] sm:$0xff]
    %v228 = vld [vmem:[#allocation5 + $0x220] sm:$0xff]
    %v229 = vld [vmem:[#allocation5 + $0x228] sm:$0xff]
    %v230 = vld [vmem:[#allocation5 + $0x230] sm:$0xff]
    %v231 = vld [vmem:[#allocation5 + $0x238] sm:$0xff]
    %v232 = vld [vmem:[#allocation5 + $0x240] sm:$0xff]
    %v233 = vld [vmem:[#allocation5 + $0x248] sm:$0xff]
    %v234 = vld [vmem:[#allocation5 + $0x250] sm:$0xff]
    %v235 = vld [vmem:[#allocation5 + $0x258] sm:$0xff]
    %v236 = vld [vmem:[#allocation5 + $0x260] sm:$0xff]
    %v237 = vld [vmem:[#allocation5 + $0x268] sm:$0xff]
    %v238 = vld [vmem:[#allocation5 + $0x270] sm:$0xff]
    %v239 = vld [vmem:[#allocation5 + $0x278] sm:$0xff]
    %v240 = vld [vmem:[#allocation5 + $0x280] sm:$0xff]
    %v241 = vld [vmem:[#allocation5 + $0x288] sm:$0xff]
    %v242 = vld [vmem:[#allocation5 + $0x290] sm:$0xff]
    %v243 = vld [vmem:[#allocation5 + $0x298] sm:$0xff]
    %v244 = vld [vmem:[#allocation5 + $0x2a0] sm:$0xff]
    %v245 = vld [vmem:[#allocation5 + $0x2a8] sm:$0xff]
    %v246 = vld [vmem:[#allocation5 + $0x2b0] sm:$0xff]
    %v247 = vld [vmem:[#allocation5 + $0x2b8] sm:$0xff]
    %v248 = vld [vmem:[#allocation5 + $0x2c0] sm:$0xff]
    %v249 = vld [vmem:[#allocation5 + $0x2c8] sm:$0xff]
    %v250 = vld [vmem:[#allocation5 + $0x2d0] sm:$0xff]
    %v251 = vld [vmem:[#allocation5 + $0x2d8] sm:$0xff]
    %v252 = vld [vmem:[#allocation5 + $0x2e0] sm:$0xff]
    %v253 = vld [vmem:[#allocation5 + $0x2e8] sm:$0xff]
    %v254 = vld [vmem:[#allocation5 + $0x2f0] sm:$0xff]
    %v255 = vld [vmem:[#allocation5 + $0x2f8] sm:$0xff]
    %v256 = vld [vmem:[#allocation5 + $0x300] sm:$0xff]
    %v257 = vld [vmem:[#allocation5 + $0x308] sm:$0xff]
    %v258 = vld [vmem:[#allocation5 + $0x310] sm:$0xff]
    %v259 = vld [vmem:[#allocation5 + $0x318] sm:$0xff]
    %v260 = vld [vmem:[#allocation5 + $0x320] sm:$0xff]
    %v261 = vld [vmem:[#allocation5 + $0x328] sm:$0xff]
    %v262 = vld [vmem:[#allocation5 + $0x330] sm:$0xff]
    %v263 = vld [vmem:[#allocation5 + $0x338] sm:$0xff]
    %v264 = vld [vmem:[#allocation5 + $0x340] sm:$0xff]
    %v265 = vld [vmem:[#allocation5 + $0x348] sm:$0xff]
    %v266 = vld [vmem:[#allocation5 + $0x350] sm:$0xff]
    %v267 = vld [vmem:[#allocation5 + $0x358] sm:$0xff]
    %v268 = vld [vmem:[#allocation5 + $0x360] sm:$0xff]
    %v269 = vld [vmem:[#allocation5 + $0x368] sm:$0xff]
    %v270 = vld [vmem:[#allocation5 + $0x370] sm:$0xff]
    %v271 = vld [vmem:[#allocation5 + $0x378] sm:$0xff]
    %v272 = vld [vmem:[#allocation7] sm:$0x1]
    %v274 = vperm.slane %v272, 0
    %276 = vmatpush.msra.mxu0 %v175
    %277 = vmatpush.msra.mxu0 %v174
    %278 = vmatpush.msra.mxu0 %v173
    %279 = vmatpush.msra.mxu0 %v172
    %280 = vmatpush.msra.mxu0 %v171
    %281 = vmatpush.msra.mxu0 %v170
    %282 = vmatpush.msra.mxu0 %v169
    %283 = vmatpush.msra.mxu0 %v168
    %284 = vmatpush.msra.mxu0 %v167
    %285 = vmatpush.msra.mxu0 %v166
    %286 = vmatpush.msra.mxu0 %v165
    %287 = vmatpush.msra.mxu0 %v164
    %288 = vmatpush.msra.mxu0 %v163
    %289 = vmatpush.msra.mxu0 %v162
    %290 = vmatpush.msra.mxu0 %v161
    %291 = vmatpush.msra.mxu0 %v160
    %292 = vmatmul.f32.gmra.mxu0 %v153
    %v293 = vpop.f32.mrf.mxu0
    %v294 = vadd.f32 %v274, %v293
    %295 = vdwg.mxu0
    %296 = vmatpush.msra.mxu0 %v191
    %297 = vmatpush.msra.mxu0 %v190
    %298 = vmatpush.msra.mxu0 %v189
    %299 = vmatpush.msra.mxu0 %v188
    %300 = vmatpush.msra.mxu0 %v187
    %301 = vmatpush.msra.mxu0 %v186
    %302 = vmatpush.msra.mxu0 %v185
    %303 = vmatpush.msra.mxu0 %v184
    %304 = vmatpush.msra.mxu0 %v183
    %305 = vmatpush.msra.mxu0 %v182
    %306 = vmatpush.msra.mxu0 %v181
    %307 = vmatpush.msra.mxu0 %v180
    %308 = vmatpush.msra.mxu0 %v179
    %309 = vmatpush.msra.mxu0 %v178
    %310 = vmatpush.msra.mxu0 %v177
    %311 = vmatpush.msra.mxu0 %v176
    %312 = vmatmul.f32.gmra.mxu0 %v154
    %v313 = vpop.f32.mrf.mxu0
    %v314 = vadd.f32 %v294, %v313
    %315 = vdwg.mxu0
    %316 = vmatpush.msra.mxu0 %v207
    %317 = vmatpush.msra.mxu0 %v206
    %318 = vmatpush.msra.mxu0 %v205
    %319 = vmatpush.msra.mxu0 %v204
    %320 = vmatpush.msra.mxu0 %v203
    %321 = vmatpush.msra.mxu0 %v202
    %322 = vmatpush.msra.mxu0 %v201
    %323 = vmatpush.msra.mxu0 %v200
    %324 = vmatpush.msra.mxu0 %v199
    %325 = vmatpush.msra.mxu0 %v198
    %326 = vmatpush.msra.mxu0 %v197
    %327 = vmatpush.msra.mxu0 %v196
    %328 = vmatpush.msra.mxu0 %v195
    %329 = vmatpush.msra.mxu0 %v194
    %330 = vmatpush.msra.mxu0 %v193
    %331 = vmatpush.msra.mxu0 %v192
    %332 = vmatmul.f32.gmra.mxu0 %v155
    %v333 = vpop.f32.mrf.mxu0
    %v334 = vadd.f32 %v314, %v333
    %335 = vdwg.mxu0
    %336 = vmatpush.msra.mxu0 %v223
    %337 = vmatpush.msra.mxu0 %v222
    %338 = vmatpush.msra.mxu0 %v221
    %339 = vmatpush.msra.mxu0 %v220
    %340 = vmatpush.msra.mxu0 %v219
    %341 = vmatpush.msra.mxu0 %v218
    %342 = vmatpush.msra.mxu0 %v217
    %343 = vmatpush.msra.mxu0 %v216
    %344 = vmatpush.msra.mxu0 %v215
    %345 = vmatpush.msra.mxu0 %v214
    %346 = vmatpush.msra.mxu0 %v213
    %347 = vmatpush.msra.mxu0 %v212
    %348 = vmatpush.msra.mxu0 %v211
    %349 = vmatpush.msra.mxu0 %v210
    %350 = vmatpush.msra.mxu0 %v209
    %351 = vmatpush.msra.mxu0 %v208
    %352 = vmatmul.f32.gmra.mxu0 %v156
    %v353 = vpop.f32.mrf.mxu0
    %v354 = vadd.f32 %v334, %v353
    %355 = vdwg.mxu0
    %356 = vmatpush.msra.mxu0 %v239
    %357 = vmatpush.msra.mxu0 %v238
    %358 = vmatpush.msra.mxu0 %v237
    %359 = vmatpush.msra.mxu0 %v236
    %360 = vmatpush.msra.mxu0 %v235
    %361 = vmatpush.msra.mxu0 %v234
    %362 = vmatpush.msra.mxu0 %v233
    %363 = vmatpush.msra.mxu0 %v232
    %364 = vmatpush.msra.mxu0 %v231
    %365 = vmatpush.msra.mxu0 %v230
    %366 = vmatpush.msra.mxu0 %v229
    %367 = vmatpush.msra.mxu0 %v228
    %368 = vmatpush.msra.mxu0 %v227
    %369 = vmatpush.msra.mxu0 %v226
    %370 = vmatpush.msra.mxu0 %v225
    %371 = vmatpush.msra.mxu0 %v224
    %372 = vmatmul.f32.gmra.mxu0 %v157
    %v373 = vpop.f32.mrf.mxu0
    %v374 = vadd.f32 %v354, %v373
    %375 = vdwg.mxu0
    %376 = vmatpush.msra.mxu0 %v255
    %377 = vmatpush.msra.mxu0 %v254
    %378 = vmatpush.msra.mxu0 %v253
    %379 = vmatpush.msra.mxu0 %v252
    %380 = vmatpush.msra.mxu0 %v251
    %381 = vmatpush.msra.mxu0 %v250
    %382 = vmatpush.msra.mxu0 %v249
    %383 = vmatpush.msra.mxu0 %v248
    %384 = vmatpush.msra.mxu0 %v247
    %385 = vmatpush.msra.mxu0 %v246
    %386 = vmatpush.msra.mxu0 %v245
    %387 = vmatpush.msra.mxu0 %v244
    %388 = vmatpush.msra.mxu0 %v243
    %389 = vmatpush.msra.mxu0 %v242
    %390 = vmatpush.msra.mxu0 %v241
    %391 = vmatpush.msra.mxu0 %v240
    %392 = vmatmul.f32.gmra.mxu0 %v158
    %v393 = vpop.f32.mrf.mxu0
    %v394 = vadd.f32 %v374, %v393
    %395 = vdwg.mxu0
    %396 = vmatpush.msra.mxu0 %v271
    %397 = vmatpush.msra.mxu0 %v270
    %398 = vmatpush.msra.mxu0 %v269
    %399 = vmatpush.msra.mxu0 %v268
    %400 = vmatpush.msra.mxu0 %v267
    %401 = vmatpush.msra.mxu0 %v266
    %402 = vmatpush.msra.mxu0 %v265
    %403 = vmatpush.msra.mxu0 %v264
    %404 = vmatpush.msra.mxu0 %v263
    %405 = vmatpush.msra.mxu0 %v262
    %406 = vmatpush.msra.mxu0 %v261
    %407 = vmatpush.msra.mxu0 %v260
    %408 = vmatpush.msra.mxu0 %v259
    %409 = vmatpush.msra.mxu0 %v258
    %410 = vmatpush.msra.mxu0 %v257
    %411 = vmatpush.msra.mxu0 %v256
    %412 = vmatmul.f32.gmra.mxu0 %v159
    %v413 = vpop.f32.mrf.mxu0
    %v414 = vadd.f32 %v394, %v413
    %415 = vdwg.mxu0
    %v416 = vmax.f32 %v414, 0.0
    %v417 = vld [vmem:[#allocation8] sm:$0xff]
    %v418 = vld [vmem:[#allocation8 + $0x8] sm:$0xff]
    %v419 = vld [vmem:[#allocation8 + $0x10] sm:$0xff]
    %v420 = vld [vmem:[#allocation8 + $0x18] sm:$0xff]
    %v421 = vld [vmem:[#allocation8 + $0x20] sm:$0xff]
    %v422 = vld [vmem:[#allocation8 + $0x28] sm:$0xff]
    %v423 = vld [vmem:[#allocation8 + $0x30] sm:$0xff]
    %v424 = vld [vmem:[#allocation8 + $0x38] sm:$0xff]
    %v425 = vld [vmem:[#allocation8 + $0x40] sm:$0xff]
    %v426 = vld [vmem:[#allocation8 + $0x48] sm:$0xff]
    %v427 = vld [vmem:[#allocation8 + $0x50] sm:$0xff]
    %v428 = vld [vmem:[#allocation8 + $0x58] sm:$0xff]
    %v429 = vld [vmem:[#allocation8 + $0x60] sm:$0xff]
    %v430 = vld [vmem:[#allocation8 + $0x68] sm:$0xff]
    %v431 = vld [vmem:[#allocation8 + $0x70] sm:$0xff]
    %v432 = vld [vmem:[#allocation8 + $0x78] sm:$0xff]
    %v433 = vld [vmem:[#allocation10] sm:$0x1]
    %v435 = vperm.slane %v433, 0
    %437 = vmatpush.msra.mxu0 %v432
    %438 = vmatpush.msra.mxu0 %v431
    %439 = vmatpush.msra.mxu0 %v430
    %440 = vmatpush.msra.mxu0 %v429
    %441 = vmatpush.msra.mxu0 %v428
    %442 = vmatpush.msra.mxu0 %v427
    %443 = vmatpush.msra.mxu0 %v426
    %444 = vmatpush.msra.mxu0 %v425
    %445 = vmatpush.msra.mxu0 %v424
    %446 = vmatpush.msra.mxu0 %v423
    %447 = vmatpush.msra.mxu0 %v422
    %448 = vmatpush.msra.mxu0 %v421
    %449 = vmatpush.msra.mxu0 %v420
    %450 = vmatpush.msra.mxu0 %v419
    %451 = vmatpush.msra.mxu0 %v418
    %452 = vmatpush.msra.mxu0 %v417
    %453 = vmatmul.f32.gmra.mxu0 %v416
    %v454 = vpop.f32.mrf.mxu0
    %v455 = vadd.f32 %v435, %v454
    %456 = vdwg.mxu0
    %v457 = vmax.f32 %v455, 0.0
    %v458 = vld [vmem:[#allocation11] sm:$0xff]
    %v459 = vld [vmem:[#allocation11 + $0x8] sm:$0xff]
    %v460 = vld [vmem:[#allocation11 + $0x10] sm:$0xff]
    %v461 = vld [vmem:[#allocation11 + $0x18] sm:$0xff]
    %v462 = vld [vmem:[#allocation11 + $0x20] sm:$0xff]
    %v463 = vld [vmem:[#allocation11 + $0x28] sm:$0xff]
    %v464 = vld [vmem:[#allocation11 + $0x30] sm:$0xff]
    %v465 = vld [vmem:[#allocation11 + $0x38] sm:$0xff]
    %v466 = vld [vmem:[#allocation11 + $0x40] sm:$0xff]
    %v467 = vld [vmem:[#allocation11 + $0x48] sm:$0xff]
    %v468 = vld [vmem:[#allocation11 + $0x50] sm:$0xff]
    %v469 = vld [vmem:[#allocation11 + $0x58] sm:$0xff]
    %v470 = vld [vmem:[#allocation11 + $0x60] sm:$0xff]
    %v471 = vld [vmem:[#allocation11 + $0x68] sm:$0xff]
    %v472 = vld [vmem:[#allocation11 + $0x70] sm:$0xff]
    %v473 = vld [vmem:[#allocation11 + $0x78] sm:$0xff]
    %v474 = vld [vmem:[#allocation13] sm:$0x1]
    %v476 = vperm.slane %v474, 0
    %478 = vmatpush.msra.mxu0 %v473
    %479 = vmatpush.msra.mxu0 %v472
    %480 = vmatpush.msra.mxu0 %v471
    %481 = vmatpush.msra.mxu0 %v470
    %482 = vmatpush.msra.mxu0 %v469
    %483 = vmatpush.msra.mxu0 %v468
    %484 = vmatpush.msra.mxu0 %v467
    %485 = vmatpush.msra.mxu0 %v466
    %486 = vmatpush.msra.mxu0 %v465
    %487 = vmatpush.msra.mxu0 %v464
    %488 = vmatpush.msra.mxu0 %v463
    %489 = vmatpush.msra.mxu0 %v462
    %490 = vmatpush.msra.mxu0 %v461
    %491 = vmatpush.msra.mxu0 %v460
    %492 = vmatpush.msra.mxu0 %v459
    %493 = vmatpush.msra.mxu0 %v458
    %494 = vmatmul.f32.gmra.mxu0 %v457
    %v495 = vpop.f32.mrf.mxu0
    %v496 = vadd.f32 %v476, %v495
    %497 = vdwg.mxu0
    %v498 = vmax.f32 %v496, 0.0
    %v499 = vld [vmem:[#allocation14] sm:$0xff]
    %v500 = vld [vmem:[#allocation14 + $0x8] sm:$0xff]
    %v501 = vld [vmem:[#allocation14 + $0x10] sm:$0xff]
    %v502 = vld [vmem:[#allocation14 + $0x18] sm:$0xff]
    %v503 = vld [vmem:[#allocation14 + $0x20] sm:$0xff]
    %v504 = vld [vmem:[#allocation14 + $0x28] sm:$0xff]
    %v505 = vld [vmem:[#allocation14 + $0x30] sm:$0xff]
    %v506 = vld [vmem:[#allocation14 + $0x38] sm:$0xff]
    %v507 = vld [vmem:[#allocation14 + $0x40] sm:$0xff]
    %v508 = vld [vmem:[#allocation14 + $0x48] sm:$0xff]
    %v509 = vld [vmem:[#allocation14 + $0x50] sm:$0xff]
    %v510 = vld [vmem:[#allocation14 + $0x58] sm:$0xff]
    %v511 = vld [vmem:[#allocation14 + $0x60] sm:$0xff]
    %v512 = vld [vmem:[#allocation14 + $0x68] sm:$0xff]
    %v513 = vld [vmem:[#allocation14 + $0x70] sm:$0xff]
    %v514 = vld [vmem:[#allocation14 + $0x78] sm:$0xff]
    %v515 = vld [vmem:[#allocation14 + $0x80] sm:$0xff]
    %v516 = vld [vmem:[#allocation14 + $0x88] sm:$0xff]
    %v517 = vld [vmem:[#allocation14 + $0x90] sm:$0xff]
    %v518 = vld [vmem:[#allocation14 + $0x98] sm:$0xff]
    %v519 = vld [vmem:[#allocation14 + $0xa0] sm:$0xff]
    %v520 = vld [vmem:[#allocation14 + $0xa8] sm:$0xff]
    %v521 = vld [vmem:[#allocation14 + $0xb0] sm:$0xff]
    %v522 = vld [vmem:[#allocation14 + $0xb8] sm:$0xff]
    %v523 = vld [vmem:[#allocation14 + $0xc0] sm:$0xff]
    %v524 = vld [vmem:[#allocation14 + $0xc8] sm:$0xff]
    %v525 = vld [vmem:[#allocation14 + $0xd0] sm:$0xff]
    %v526 = vld [vmem:[#allocation14 + $0xd8] sm:$0xff]
    %v527 = vld [vmem:[#allocation14 + $0xe0] sm:$0xff]
    %v528 = vld [vmem:[#allocation14 + $0xe8] sm:$0xff]
    %v529 = vld [vmem:[#allocation14 + $0xf0] sm:$0xff]
    %v530 = vld [vmem:[#allocation14 + $0xf8] sm:$0xff]
    %v531 = vld [vmem:[#allocation14 + $0x100] sm:$0xff]
    %v532 = vld [vmem:[#allocation14 + $0x108] sm:$0xff]
    %v533 = vld [vmem:[#allocation14 + $0x110] sm:$0xff]
    %v534 = vld [vmem:[#allocation14 + $0x118] sm:$0xff]
    %v535 = vld [vmem:[#allocation14 + $0x120] sm:$0xff]
    %v536 = vld [vmem:[#allocation14 + $0x128] sm:$0xff]
    %v537 = vld [vmem:[#allocation14 + $0x130] sm:$0xff]
    %v538 = vld [vmem:[#allocation14 + $0x138] sm:$0xff]
    %v539 = vld [vmem:[#allocation14 + $0x140] sm:$0xff]
    %v540 = vld [vmem:[#allocation14 + $0x148] sm:$0xff]
    %v541 = vld [vmem:[#allocation14 + $0x150] sm:$0xff]
    %v542 = vld [vmem:[#allocation14 + $0x158] sm:$0xff]
    %v543 = vld [vmem:[#allocation14 + $0x160] sm:$0xff]
    %v544 = vld [vmem:[#allocation14 + $0x168] sm:$0xff]
    %v545 = vld [vmem:[#allocation14 + $0x170] sm:$0xff]
    %v546 = vld [vmem:[#allocation14 + $0x178] sm:$0xff]
    %v547 = vld [vmem:[#allocation14 + $0x180] sm:$0xff]
    %v548 = vld [vmem:[#allocation14 + $0x188] sm:$0xff]
    %v549 = vld [vmem:[#allocation14 + $0x190] sm:$0xff]
    %v550 = vld [vmem:[#allocation14 + $0x198] sm:$0xff]
    %v551 = vld [vmem:[#allocation14 + $0x1a0] sm:$0xff]
    %v552 = vld [vmem:[#allocation14 + $0x1a8] sm:$0xff]
    %v553 = vld [vmem:[#allocation14 + $0x1b0] sm:$0xff]
    %v554 = vld [vmem:[#allocation14 + $0x1b8] sm:$0xff]
    %v555 = vld [vmem:[#allocation14 + $0x1c0] sm:$0xff]
    %v556 = vld [vmem:[#allocation14 + $0x1c8] sm:$0xff]
    %v557 = vld [vmem:[#allocation14 + $0x1d0] sm:$0xff]
    %v558 = vld [vmem:[#allocation14 + $0x1d8] sm:$0xff]
    %v559 = vld [vmem:[#allocation14 + $0x1e0] sm:$0xff]
    %v560 = vld [vmem:[#allocation14 + $0x1e8] sm:$0xff]
    %v561 = vld [vmem:[#allocation14 + $0x1f0] sm:$0xff]
    %v562 = vld [vmem:[#allocation14 + $0x1f8] sm:$0xff]
    %v563 = vld [vmem:[#allocation14 + $0x200] sm:$0xff]
    %v564 = vld [vmem:[#allocation14 + $0x208] sm:$0xff]
    %v565 = vld [vmem:[#allocation14 + $0x210] sm:$0xff]
    %v566 = vld [vmem:[#allocation14 + $0x218] sm:$0xff]
    %v567 = vld [vmem:[#allocation14 + $0x220] sm:$0xff]
    %v568 = vld [vmem:[#allocation14 + $0x228] sm:$0xff]
    %v569 = vld [vmem:[#allocation14 + $0x230] sm:$0xff]
    %v570 = vld [vmem:[#allocation14 + $0x238] sm:$0xff]
    %v571 = vld [vmem:[#allocation14 + $0x240] sm:$0xff]
    %v572 = vld [vmem:[#allocation14 + $0x248] sm:$0xff]
    %v573 = vld [vmem:[#allocation14 + $0x250] sm:$0xff]
    %v574 = vld [vmem:[#allocation14 + $0x258] sm:$0xff]
    %v575 = vld [vmem:[#allocation14 + $0x260] sm:$0xff]
    %v576 = vld [vmem:[#allocation14 + $0x268] sm:$0xff]
    %v577 = vld [vmem:[#allocation14 + $0x270] sm:$0xff]
    %v578 = vld [vmem:[#allocation14 + $0x278] sm:$0xff]
    %v579 = vld [vmem:[#allocation14 + $0x280] sm:$0xff]
    %v580 = vld [vmem:[#allocation14 + $0x288] sm:$0xff]
    %v581 = vld [vmem:[#allocation14 + $0x290] sm:$0xff]
    %v582 = vld [vmem:[#allocation14 + $0x298] sm:$0xff]
    %v583 = vld [vmem:[#allocation14 + $0x2a0] sm:$0xff]
    %v584 = vld [vmem:[#allocation14 + $0x2a8] sm:$0xff]
    %v585 = vld [vmem:[#allocation14 + $0x2b0] sm:$0xff]
    %v586 = vld [vmem:[#allocation14 + $0x2b8] sm:$0xff]
    %v587 = vld [vmem:[#allocation14 + $0x2c0] sm:$0xff]
    %v588 = vld [vmem:[#allocation14 + $0x2c8] sm:$0xff]
    %v589 = vld [vmem:[#allocation14 + $0x2d0] sm:$0xff]
    %v590 = vld [vmem:[#allocation14 + $0x2d8] sm:$0xff]
    %v591 = vld [vmem:[#allocation14 + $0x2e0] sm:$0xff]
    %v592 = vld [vmem:[#allocation14 + $0x2e8] sm:$0xff]
    %v593 = vld [vmem:[#allocation14 + $0x2f0] sm:$0xff]
    %v594 = vld [vmem:[#allocation14 + $0x2f8] sm:$0xff]
    %v595 = vld [vmem:[#allocation14 + $0x300] sm:$0xff]
    %v596 = vld [vmem:[#allocation14 + $0x308] sm:$0xff]
    %v597 = vld [vmem:[#allocation14 + $0x310] sm:$0xff]
    %v598 = vld [vmem:[#allocation14 + $0x318] sm:$0xff]
    %v599 = vld [vmem:[#allocation14 + $0x320] sm:$0xff]
    %v600 = vld [vmem:[#allocation14 + $0x328] sm:$0xff]
    %v601 = vld [vmem:[#allocation14 + $0x330] sm:$0xff]
    %v602 = vld [vmem:[#allocation14 + $0x338] sm:$0xff]
    %v603 = vld [vmem:[#allocation14 + $0x340] sm:$0xff]
    %v604 = vld [vmem:[#allocation14 + $0x348] sm:$0xff]
    %v605 = vld [vmem:[#allocation14 + $0x350] sm:$0xff]
    %v606 = vld [vmem:[#allocation14 + $0x358] sm:$0xff]
    %v607 = vld [vmem:[#allocation14 + $0x360] sm:$0xff]
    %v608 = vld [vmem:[#allocation14 + $0x368] sm:$0xff]
    %v609 = vld [vmem:[#allocation14 + $0x370] sm:$0xff]
    %v610 = vld [vmem:[#allocation14 + $0x378] sm:$0xff]
    %v611 = vld [vmem:[%s8] sm:$0xff]
    %v613 = vperm.slane %v611, 0
    %v614 = vperm.slane %v611, 1
    %v615 = vperm.slane %v611, 2
    %v616 = vperm.slane %v611, 3
    %v617 = vperm.slane %v611, 4
    %v618 = vperm.slane %v611, 5
    %v619 = vperm.slane %v611, 6
    %627 = vmatpush.msra.mxu0 %v604
    %628 = vmatpush.msra.mxu0 %v597
    %629 = vmatpush.msra.mxu0 %v590
    %630 = vmatpush.msra.mxu0 %v583
    %631 = vmatpush.msra.mxu0 %v576
    %632 = vmatpush.msra.mxu0 %v569
    %633 = vmatpush.msra.mxu0 %v562
    %634 = vmatpush.msra.mxu0 %v555
    %635 = vmatpush.msra.mxu0 %v548
    %636 = vmatpush.msra.mxu0 %v541
    %637 = vmatpush.msra.mxu0 %v534
    %638 = vmatpush.msra.mxu0 %v527
    %639 = vmatpush.msra.mxu0 %v520
    %640 = vmatpush.msra.mxu0 %v513
    %641 = vmatpush.msra.mxu0 %v506
    %642 = vmatpush.msra.mxu0 %v499
    %643 = vmatmul.f32.gmra.mxu0 %v498
    %v644 = vpop.f32.mrf.mxu0
    %v645 = vadd.f32 %v613, %v644
    %646 = vdwg.mxu0
    %647 = vmatpush.msra.mxu0 %v605
    %648 = vmatpush.msra.mxu0 %v598
    %649 = vmatpush.msra.mxu0 %v591
    %650 = vmatpush.msra.mxu0 %v584
    %651 = vmatpush.msra.mxu0 %v577
    %652 = vmatpush.msra.mxu0 %v570
    %653 = vmatpush.msra.mxu0 %v563
    %654 = vmatpush.msra.mxu0 %v556
    %655 = vmatpush.msra.mxu0 %v549
    %656 = vmatpush.msra.mxu0 %v542
    %657 = vmatpush.msra.mxu0 %v535
    %658 = vmatpush.msra.mxu0 %v528
    %659 = vmatpush.msra.mxu0 %v521
    %660 = vmatpush.msra.mxu0 %v514
    %661 = vmatpush.msra.mxu0 %v507
    %662 = vmatpush.msra.mxu0 %v500
    %663 = vmatmul.f32.gmra.mxu0 %v498
    %v664 = vpop.f32.mrf.mxu0
    %v665 = vadd.f32 %v614, %v664
    %666 = vdwg.mxu0
    %667 = vmatpush.msra.mxu0 %v606
    %668 = vmatpush.msra.mxu0 %v599
    %669 = vmatpush.msra.mxu0 %v592
    %670 = vmatpush.msra.mxu0 %v585
    %671 = vmatpush.msra.mxu0 %v578
    %672 = vmatpush.msra.mxu0 %v571
    %673 = vmatpush.msra.mxu0 %v564
    %674 = vmatpush.msra.mxu0 %v557
    %675 = vmatpush.msra.mxu0 %v550
    %676 = vmatpush.msra.mxu0 %v543
    %677 = vmatpush.msra.mxu0 %v536
    %678 = vmatpush.msra.mxu0 %v529
    %679 = vmatpush.msra.mxu0 %v522
    %680 = vmatpush.msra.mxu0 %v515
    %681 = vmatpush.msra.mxu0 %v508
    %682 = vmatpush.msra.mxu0 %v501
    %683 = vmatmul.f32.gmra.mxu0 %v498
    %v684 = vpop.f32.mrf.mxu0
    %v685 = vadd.f32 %v615, %v684
    %686 = vdwg.mxu0
    %687 = vmatpush.msra.mxu0 %v607
    %688 = vmatpush.msra.mxu0 %v600
    %689 = vmatpush.msra.mxu0 %v593
    %690 = vmatpush.msra.mxu0 %v586
    %691 = vmatpush.msra.mxu0 %v579
    %692 = vmatpush.msra.mxu0 %v572
    %693 = vmatpush.msra.mxu0 %v565
    %694 = vmatpush.msra.mxu0 %v558
    %695 = vmatpush.msra.mxu0 %v551
    %696 = vmatpush.msra.mxu0 %v544
    %697 = vmatpush.msra.mxu0 %v537
    %698 = vmatpush.msra.mxu0 %v530
    %699 = vmatpush.msra.mxu0 %v523
    %700 = vmatpush.msra.mxu0 %v516
    %701 = vmatpush.msra.mxu0 %v509
    %702 = vmatpush.msra.mxu0 %v502
    %703 = vmatmul.f32.gmra.mxu0 %v498
    %v704 = vpop.f32.mrf.mxu0
    %v705 = vadd.f32 %v616, %v704
    %706 = vdwg.mxu0
    %707 = vmatpush.msra.mxu0 %v608
    %708 = vmatpush.msra.mxu0 %v601
    %709 = vmatpush.msra.mxu0 %v594
    %710 = vmatpush.msra.mxu0 %v587
    %711 = vmatpush.msra.mxu0 %v580
    %712 = vmatpush.msra.mxu0 %v573
    %713 = vmatpush.msra.mxu0 %v566
    %714 = vmatpush.msra.mxu0 %v559
    %715 = vmatpush.msra.mxu0 %v552
    %716 = vmatpush.msra.mxu0 %v545
    %717 = vmatpush.msra.mxu0 %v538
    %718 = vmatpush.msra.mxu0 %v531
    %719 = vmatpush.msra.mxu0 %v524
    %720 = vmatpush.msra.mxu0 %v517
    %721 = vmatpush.msra.mxu0 %v510
    %722 = vmatpush.msra.mxu0 %v503
    %723 = vmatmul.f32.gmra.mxu0 %v498
    %v724 = vpop.f32.mrf.mxu0
    %v725 = vadd.f32 %v617, %v724
    %726 = vdwg.mxu0
    %727 = vmatpush.msra.mxu0 %v609
    %728 = vmatpush.msra.mxu0 %v602
    %729 = vmatpush.msra.mxu0 %v595
    %730 = vmatpush.msra.mxu0 %v588
    %731 = vmatpush.msra.mxu0 %v581
    %732 = vmatpush.msra.mxu0 %v574
    %733 = vmatpush.msra.mxu0 %v567
    %734 = vmatpush.msra.mxu0 %v560
    %735 = vmatpush.msra.mxu0 %v553
    %736 = vmatpush.msra.mxu0 %v546
    %737 = vmatpush.msra.mxu0 %v539
    %738 = vmatpush.msra.mxu0 %v532
    %739 = vmatpush.msra.mxu0 %v525
    %740 = vmatpush.msra.mxu0 %v518
    %741 = vmatpush.msra.mxu0 %v511
    %742 = vmatpush.msra.mxu0 %v504
    %743 = vmatmul.f32.gmra.mxu0 %v498
    %v744 = vpop.f32.mrf.mxu0
    %v745 = vadd.f32 %v618, %v744
    %746 = vdwg.mxu0
    %747 = vmatpush.msra.mxu0 %v610
    %748 = vmatpush.msra.mxu0 %v603
    %749 = vmatpush.msra.mxu0 %v596
    %750 = vmatpush.msra.mxu0 %v589
    %751 = vmatpush.msra.mxu0 %v582
    %752 = vmatpush.msra.mxu0 %v575
    %753 = vmatpush.msra.mxu0 %v568
    %754 = vmatpush.msra.mxu0 %v561
    %755 = vmatpush.msra.mxu0 %v554
    %756 = vmatpush.msra.mxu0 %v547
    %757 = vmatpush.msra.mxu0 %v540
    %758 = vmatpush.msra.mxu0 %v533
    %759 = vmatpush.msra.mxu0 %v526
    %760 = vmatpush.msra.mxu0 %v519
    %761 = vmatpush.msra.mxu0 %v512
    %762 = vmatpush.msra.mxu0 %v505
    %763 = vmatmul.f32.gmra.mxu0 %v498
    %v764 = vpop.f32.mrf.mxu0
    %v765 = vadd.f32 %v619, %v764
    %766 = vdwg.mxu0
    %v767 = vmax.f32 %v645, 0.0
    %v768 = vmax.f32 %v665, 0.0
    %v769 = vmax.f32 %v685, 0.0
    %v770 = vmax.f32 %v705, 0.0
    %v771 = vmax.f32 %v725, 0.0
    %v772 = vmax.f32 %v745, 0.0
    %v773 = vmax.f32 %v765, 0.0
    %774 = vst [vmem:[#allocation16] sm:$0xff] %v457
    %775 = vst [vmem:[#allocation17] sm:$0xff] %v767
    %776 = vst [vmem:[#allocation17 + $0x8] sm:$0xff] %v768
    %777 = vst [vmem:[#allocation17 + $0x10] sm:$0xff] %v769
    %778 = vst [vmem:[#allocation17 + $0x18] sm:$0xff] %v770
    %779 = vst [vmem:[#allocation17 + $0x20] sm:$0xff] %v771
    %780 = vst [vmem:[#allocation17 + $0x28] sm:$0xff] %v772
    %781 = vst [vmem:[#allocation17 + $0x30] sm:$0xff] %v773
    // Predicated region
    $region70: #{tpu_custom_call.1} parent=1 // pred_check
      _
    $region71: #{tpu_custom_call.1} parent=1 // pred_check_branch
      %783 = sbr.rel (0) target = $region73
    $region72: #{tpu_custom_call.1} parent=1 // pred_region
      %785 = vsyncadd [#allocation4], 0
      %s787 = sshll.u32 [#allocation16], 4
      %s788 = int_to_ptr.vmem [resolvable:$true] %s787
      %s789 = sshll.u32 %s9, 4
      %s790 = int_to_ptr.hbm [resolvable:$true] %s789
      %792 = dma.vmem_to_hbm [thread:$0]  %s788, 128, %s790, [#allocation4]
    $region73: #{tpu_custom_call.1} parent=1 // pred_fallthru
      _
    // Predicated region
    $region74: #{tpu_custom_call.1} parent=1 // pred_check
      _
    $region75: #{tpu_custom_call.1} parent=1 // pred_check_branch
      %794 = sbr.rel (0) target = $region77
    $region76: #{tpu_custom_call.1} parent=1 // pred_region
      %796 = vsyncadd [#allocation18], 0
      %s798 = sshll.u32 [#allocation17], 4
      %s799 = int_to_ptr.vmem [resolvable:$true] %s798
      %s800 = sshll.u32 %s10, 4
      %s801 = int_to_ptr.hbm [resolvable:$true] %s800
      %803 = dma.vmem_to_hbm [thread:$0]  %s799, 896, %s801, [#allocation18]
    $region77: #{tpu_custom_call.1} parent=1 // pred_fallthru
      _
    // Predicated region
    $region78: #{tpu_custom_call.1} parent=1 // pred_check
      _
    $region79: #{tpu_custom_call.1} parent=1 // pred_check_branch
      %805 = sbr.rel (0) target = $region81
    $region80: #{tpu_custom_call.1} parent=1 // pred_region
      %807 = dma.done [#allocation4], 128
    $region81: #{tpu_custom_call.1} parent=1 // pred_fallthru
      _
    // Predicated region
    $region82: #{tpu_custom_call.1} parent=1 // pred_check
      _
    $region83: #{tpu_custom_call.1} parent=1 // pred_check_branch
      %809 = sbr.rel (0) target = $region85
    $region84: #{tpu_custom_call.1} parent=1 // pred_region
      %811 = dma.done [#allocation18], 896
    $region85: #{tpu_custom_call.1} parent=1 // pred_fallthru
      _
    %812 = vsyncpa [#allocation3], 1
    %813 = vsyncpa [#allocation6], 1
    %814 = vsyncpa [#allocation9], 1
    %815 = vsyncpa [#allocation12], 1
    %816 = vsyncpa [#allocation15], 1
    %817 = vsyncpa [#allocation4], 1
    %818 = vsyncpa [#allocation18], 1

</llo_original>
